<compile_context>
chip_gen: v6e
topology: v6e:2x2x1
jax: 0.10.0
libtpu: 0.0.40
codegen_flags: <defaults>
</compile_context>

<pallas_src>
import jax
import jax.numpy as jnp
from jax.experimental import pallas as pl
from jax.experimental.pallas import tpu as pltpu

EPS = 1e-5
LANE = 128


# ----------------------------------------------------------------------------
# Kernel: fused 3 x (Linear[BN folded] + ReLU) + Linear on one batch tile.
# ----------------------------------------------------------------------------
def _mlp_kernel(x_ref, w1, b1, w2, b2, w3, b3, w4, b4, o_ref):
    def layer(h, w_r, b_r, relu):
        # Matmul operands in the weight dtype (bf16 default, f32 optional);
        # f32 MXU accumulation; bias + ReLU epilogue in f32 (biases stored f32).
        y = jnp.dot(h.astype(w_r.dtype), w_r[...],
                    preferred_element_type=jnp.float32) + b_r[...]
        return jnp.maximum(y, 0.0) if relu else y

    h = x_ref[...]                    # f32 tile; cast to bf16 inside layer()
    h = layer(h, w1, b1, True)
    h = layer(h, w2, b2, True)
    h = layer(h, w3, b3, True)
    o_ref[...] = layer(h, w4, b4, False).astype(o_ref.dtype)


# ----------------------------------------------------------------------------
# Host-side helpers: BN folding + lane padding (call ONCE; params are constants).
# ----------------------------------------------------------------------------
def _round_up(n, m):
    return ((n + m - 1) // m) * m


def _pad2d(a, rows, cols):
    return jnp.pad(a, ((0, rows - a.shape[0]), (0, cols - a.shape[1])))


def fold_params(params, *, param_dtype=jnp.bfloat16):
    """Fold eval-mode BN into each Linear; zero-pad hidden widths to 128 lanes.

    The final (output) layer keeps its true width so the kernel stores only the
    real output columns.  Call once at load time, not per forward."""
    n_hidden = (len(params) - 2) // 6
    folded = []
    prev = params[0].shape[0]                         # input feature width (unpadded)
    for i in range(n_hidden):
        w, b, g, be, m, v = params[6 * i:6 * i + 6]
        scale = g * jax.lax.rsqrt(v + EPS)            # (1, h)
        wf = w * scale                                # (prev, h)
        bf = (b - m) * scale + be                     # (1, h)
        h_pad = _round_up(w.shape[1], LANE)
        folded.append(_pad2d(wf, prev, h_pad).astype(param_dtype))
        folded.append(_pad2d(bf, 1, h_pad).astype(jnp.float32))
        prev = h_pad
    w_out, b_out = params[-2], params[-1]             # (prev_real, out), (1, out)
    folded.append(_pad2d(w_out, prev, w_out.shape[1]).astype(param_dtype))
    folded.append(b_out.astype(jnp.float32))
    return tuple(folded)


# ----------------------------------------------------------------------------
# Wrapper.
# ----------------------------------------------------------------------------
def _choose_block_b(B, block_b):
    # Clamp: at least one 8-row sublane group; never more than half the batch
    # (rounded to 8) so large batches produce >= 2 grid steps (v7x megacore);
    # never above the requested cap.
    return max(8, min(block_b, _round_up(pl.cdiv(B, 2), 8)))


def treasury_nn_forward(x, folded_params, *, block_b=2048):
    """Fused Treasury MLP forward.

    x: (B, input_size) f32.  folded_params: tuple from fold_params() (BN already
    folded, hidden widths lane-padded, weights already in the kernel dtype)."""
    B, in_features = x.shape
    output_size = folded_params[-1].shape[-1]

    bb = _choose_block_b(B, block_b)
    grid = (pl.cdiv(B, bb),)                          # ragged boundary block is masked

    in_specs = [pl.BlockSpec((bb, in_features), lambda i: (i, 0))]
    # Whole-array, constant-index parameter blocks: resident in VMEM across the grid.
    in_specs += [pl.BlockSpec(p.shape, lambda i: (0, 0)) for p in folded_params]
    # Narrow (bb, output_size) store: ~18x fewer output HBM bytes than a 128-padded
    # store, and no post-kernel slice.  Total output traffic is tiny either way.
    out_spec = pl.BlockSpec((bb, output_size), lambda i: (i, 0))

    return pl.pallas_call(
        _mlp_kernel,
        out_shape=jax.ShapeDtypeStruct((B, output_size), jnp.float32),
        grid_spec=pltpu.PrefetchScalarGridSpec(
            num_scalar_prefetch=0,
            grid=grid,
            in_specs=in_specs,
            out_specs=out_spec,
        ),
        compiler_params=pltpu.CompilerParams(
            dimension_semantics=("parallel",)),
    )(x, *folded_params)


# ----------------------------------------------------------------------------
# Synthetic parameters + pure-JAX reference (eval-mode semantics).
# ----------------------------------------------------------------------------
def init_params(key, input_size, hidden_sizes=(128, 64, 32), output_size=7):
    params = []
    prev = input_size
    sizes = list(hidden_sizes)
    keys = jax.random.split(key, 2 * (len(sizes) + 1) + 4 * len(sizes))
    ki = 0

    def nxt():
        nonlocal ki
        k = keys[ki]
        ki += 1
        return k

    for h in sizes:
        w = jax.random.normal(nxt(), (prev, h), jnp.float32) * (1.0 / jnp.sqrt(prev))
        b = jax.random.normal(nxt(), (1, h), jnp.float32) * 0.01
        gamma = 1.0 + 0.1 * jax.random.normal(nxt(), (1, h), jnp.float32)
        beta = 0.05 * jax.random.normal(nxt(), (1, h), jnp.float32)
        rmean = 0.1 * jax.random.normal(nxt(), (1, h), jnp.float32)
        rvar = jnp.abs(1.0 + 0.1 * jax.random.normal(nxt(), (1, h), jnp.float32))
        params.extend([w, b, gamma, beta, rmean, rvar])
        prev = h
    w_out = jax.random.normal(nxt(), (prev, output_size), jnp.float32) * (1.0 / jnp.sqrt(prev))
    b_out = jax.random.normal(nxt(), (1, output_size), jnp.float32) * 0.01
    params.extend([w_out, b_out])
    return tuple(params)


def reference_forward(x, params):
    h = x
    n_hidden = (len(params) - 2) // 6
    for i in range(n_hidden):
        w, b, g, be, m, v = params[6 * i:6 * i + 6]
        h = jnp.dot(h, w, precision=jax.lax.Precision.HIGHEST) + b
        h = (h - m) / jnp.sqrt(v + EPS) * g + be
        h = jnp.maximum(h, 0.0)
    w_out, b_out = params[-2], params[-1]
    return jnp.dot(h, w_out, precision=jax.lax.Precision.HIGHEST) + b_out


if __name__ == "__main__":
    key = jax.random.PRNGKey(0)
    k_x, k_p, k_x2 = jax.random.split(key, 3)

    input_size = 16  # number of Treasury feature columns (small synthetic choice)
    params = init_params(k_p, input_size)

    # Fold/pad once (inference constants) — not inside the per-call path.
    fp_bf16 = fold_params(params, param_dtype=jnp.bfloat16)   # default fast path
    fp_f32 = fold_params(params, param_dtype=jnp.float32)     # precision check path

    fwd = jax.jit(treasury_nn_forward, static_argnames=("block_b",))

    # ---- Small batch (latency path): single 8-row tile, no oversized padding.
    batch = 8
    x = jax.random.normal(k_x, (batch, input_size), jnp.float32)
    ref = reference_forward(x, params)

    out_f32 = jax.block_until_ready(fwd(x, fp_f32))
    assert out_f32.shape == (batch, 7)
    assert jnp.allclose(out_f32, ref, atol=1e-3, rtol=1e-3), "f32 mismatch vs reference"

    out_bf16 = jax.block_until_ready(fwd(x, fp_bf16))
    assert out_bf16.shape == (batch, 7)
    assert jnp.allclose(out_bf16, ref, atol=1.5e-1, rtol=1e-1), "bf16 mismatch vs reference"

    # ---- Ragged multi-tile batch: exercises cdiv grid + masked boundary writes.
    batch2 = 300
    x2 = jax.random.normal(k_x2, (batch2, input_size), jnp.float32)
    ref2 = reference_forward(x2, params)
    out2 = jax.block_until_ready(fwd(x2, fp_f32, block_b=128))
    assert out2.shape == (batch2, 7)
    assert jnp.allclose(out2, ref2, atol=1e-3, rtol=1e-3), "ragged-grid mismatch vs reference"

    print("KERNEL_OK")
</pallas_src>

<mosaic_0001>
module attributes {stable_mosaic.version = 11 : i64} {
  func.func @_mlp_kernel(%arg0: i32, %arg1: memref<8x16xf32, #tpu.memory_space<vmem>>, %arg2: memref<16x128xf32, #tpu.memory_space<vmem>>, %arg3: memref<1x128xf32, #tpu.memory_space<vmem>>, %arg4: memref<128x128xf32, #tpu.memory_space<vmem>>, %arg5: memref<1x128xf32, #tpu.memory_space<vmem>>, %arg6: memref<128x128xf32, #tpu.memory_space<vmem>>, %arg7: memref<1x128xf32, #tpu.memory_space<vmem>>, %arg8: memref<128x7xf32, #tpu.memory_space<vmem>>, %arg9: memref<1x7xf32, #tpu.memory_space<vmem>>, %arg10: memref<8x7xf32, #tpu.memory_space<vmem>>) attributes {dimension_semantics = [#tpu.dimension_semantics<parallel>], iteration_bounds = array<i64: 1>, scalar_prefetch = 0 : i64, scratch_operands = 0 : i64, tpu.core_type = #tpu.core_type<tc>, window_params = [{transform_indices = @transform_0, window_bounds = array<i64: 8, 16>}, {pipeline_mode = #tpu.pipeline_mode<synchronous>, transform_indices = @transform_1, window_bounds = array<i64: 16, 128>}, {pipeline_mode = #tpu.pipeline_mode<synchronous>, transform_indices = @transform_2, window_bounds = array<i64: 1, 128>}, {pipeline_mode = #tpu.pipeline_mode<synchronous>, transform_indices = @transform_3, window_bounds = array<i64: 128, 128>}, {pipeline_mode = #tpu.pipeline_mode<synchronous>, transform_indices = @transform_4, window_bounds = array<i64: 1, 128>}, {pipeline_mode = #tpu.pipeline_mode<synchronous>, transform_indices = @transform_5, window_bounds = array<i64: 128, 128>}, {pipeline_mode = #tpu.pipeline_mode<synchronous>, transform_indices = @transform_6, window_bounds = array<i64: 1, 128>}, {pipeline_mode = #tpu.pipeline_mode<synchronous>, transform_indices = @transform_7, window_bounds = array<i64: 128, 7>}, {pipeline_mode = #tpu.pipeline_mode<synchronous>, transform_indices = @transform_8, window_bounds = array<i64: 1, 7>}, {transform_indices = @transform_9, window_bounds = array<i64: 8, 7>}]} {
    %c0 = arith.constant 0 : index
    %c0_0 = arith.constant 0 : index
    %0 = vector.load %arg1[%c0, %c0_0] : memref<8x16xf32, #tpu.memory_space<vmem>>, vector<8x16xf32>
    %c0_1 = arith.constant 0 : index
    %c0_2 = arith.constant 0 : index
    %1 = vector.load %arg2[%c0_1, %c0_2] : memref<16x128xf32, #tpu.memory_space<vmem>>, vector<16x128xf32>
    %cst = arith.constant dense<0.000000e+00> : vector<8x128xf32>
    %2 = tpu.matmul %0, %1, %cst {dimension_numbers = #tpu.dot_dimension_numbers<[1], [0], [0], [1], [0, 0, 1, 1], [], []>} : vector<8x16xf32>, vector<16x128xf32>, vector<8x128xf32> -> vector<8x128xf32>
    %c0_3 = arith.constant 0 : index
    %c0_4 = arith.constant 0 : index
    %3 = vector.load %arg3[%c0_3, %c0_4] : memref<1x128xf32, #tpu.memory_space<vmem>>, vector<1x128xf32>
    %4 = vector.broadcast %3 : vector<1x128xf32> to vector<8x128xf32>
    %5 = arith.addf %2, %4 : vector<8x128xf32>
    %cst_5 = arith.constant 0.000000e+00 : f32
    %6 = vector.broadcast %cst_5 : f32 to vector<8x128xf32>
    %7 = arith.maximumf %5, %6 : vector<8x128xf32>
    %c0_6 = arith.constant 0 : index
    %c0_7 = arith.constant 0 : index
    %8 = vector.load %arg4[%c0_6, %c0_7] : memref<128x128xf32, #tpu.memory_space<vmem>>, vector<128x128xf32>
    %cst_8 = arith.constant dense<0.000000e+00> : vector<8x128xf32>
    %9 = tpu.matmul %7, %8, %cst_8 {dimension_numbers = #tpu.dot_dimension_numbers<[1], [0], [0], [1], [0, 0, 1, 1], [], []>} : vector<8x128xf32>, vector<128x128xf32>, vector<8x128xf32> -> vector<8x128xf32>
    %c0_9 = arith.constant 0 : index
    %c0_10 = arith.constant 0 : index
    %10 = vector.load %arg5[%c0_9, %c0_10] : memref<1x128xf32, #tpu.memory_space<vmem>>, vector<1x128xf32>
    %11 = vector.broadcast %10 : vector<1x128xf32> to vector<8x128xf32>
    %12 = arith.addf %9, %11 : vector<8x128xf32>
    %cst_11 = arith.constant 0.000000e+00 : f32
    %13 = vector.broadcast %cst_11 : f32 to vector<8x128xf32>
    %14 = arith.maximumf %12, %13 : vector<8x128xf32>
    %c0_12 = arith.constant 0 : index
    %c0_13 = arith.constant 0 : index
    %15 = vector.load %arg6[%c0_12, %c0_13] : memref<128x128xf32, #tpu.memory_space<vmem>>, vector<128x128xf32>
    %cst_14 = arith.constant dense<0.000000e+00> : vector<8x128xf32>
    %16 = tpu.matmul %14, %15, %cst_14 {dimension_numbers = #tpu.dot_dimension_numbers<[1], [0], [0], [1], [0, 0, 1, 1], [], []>} : vector<8x128xf32>, vector<128x128xf32>, vector<8x128xf32> -> vector<8x128xf32>
    %c0_15 = arith.constant 0 : index
    %c0_16 = arith.constant 0 : index
    %17 = vector.load %arg7[%c0_15, %c0_16] : memref<1x128xf32, #tpu.memory_space<vmem>>, vector<1x128xf32>
    %18 = vector.broadcast %17 : vector<1x128xf32> to vector<8x128xf32>
    %19 = arith.addf %16, %18 : vector<8x128xf32>
    %cst_17 = arith.constant 0.000000e+00 : f32
    %20 = vector.broadcast %cst_17 : f32 to vector<8x128xf32>
    %21 = arith.maximumf %19, %20 : vector<8x128xf32>
    %c0_18 = arith.constant 0 : index
    %c0_19 = arith.constant 0 : index
    %22 = vector.load %arg8[%c0_18, %c0_19] : memref<128x7xf32, #tpu.memory_space<vmem>>, vector<128x7xf32>
    %cst_20 = arith.constant dense<0.000000e+00> : vector<8x7xf32>
    %23 = tpu.matmul %21, %22, %cst_20 {dimension_numbers = #tpu.dot_dimension_numbers<[1], [0], [0], [1], [0, 0, 1, 1], [], []>} : vector<8x128xf32>, vector<128x7xf32>, vector<8x7xf32> -> vector<8x7xf32>
    %c0_21 = arith.constant 0 : index
    %c0_22 = arith.constant 0 : index
    %24 = vector.load %arg9[%c0_21, %c0_22] : memref<1x7xf32, #tpu.memory_space<vmem>>, vector<1x7xf32>
    %25 = vector.broadcast %24 : vector<1x7xf32> to vector<8x7xf32>
    %26 = arith.addf %23, %25 : vector<8x7xf32>
    %c0_23 = arith.constant 0 : index
    %c0_24 = arith.constant 0 : index
    %27 = vector.load %arg10[%c0_23, %c0_24] : memref<8x7xf32, #tpu.memory_space<vmem>>, vector<8x7xf32>
    tpu.vector_store %arg10[%c0_23, %c0_24], %26 {strides = array<i32>} : memref<8x7xf32, #tpu.memory_space<vmem>>, vector<8x7xf32>,
    return
  }
  func.func @transform_0(%arg0: i32) -> (i32, i32) {
    %c0_i32 = arith.constant 0 : i32
    %c0_i32_0 = arith.constant 0 : i32
    return %arg0, %c0_i32 : i32, i32
  }
  func.func @transform_1(%arg0: i32) -> (i32, i32) {
    %c0_i32 = arith.constant 0 : i32
    %c0_i32_0 = arith.constant 0 : i32
    %c0_i32_1 = arith.constant 0 : i32
    return %c0_i32, %c0_i32_0 : i32, i32
  }
  func.func @transform_2(%arg0: i32) -> (i32, i32) {
    %c0_i32 = arith.constant 0 : i32
    %c0_i32_0 = arith.constant 0 : i32
    %c0_i32_1 = arith.constant 0 : i32
    return %c0_i32, %c0_i32_0 : i32, i32
  }
  func.func @transform_3(%arg0: i32) -> (i32, i32) {
    %c0_i32 = arith.constant 0 : i32
    %c0_i32_0 = arith.constant 0 : i32
    %c0_i32_1 = arith.constant 0 : i32
    return %c0_i32, %c0_i32_0 : i32, i32
  }
  func.func @transform_4(%arg0: i32) -> (i32, i32) {
    %c0_i32 = arith.constant 0 : i32
    %c0_i32_0 = arith.constant 0 : i32
    %c0_i32_1 = arith.constant 0 : i32
    return %c0_i32, %c0_i32_0 : i32, i32
  }
  func.func @transform_5(%arg0: i32) -> (i32, i32) {
    %c0_i32 = arith.constant 0 : i32
    %c0_i32_0 = arith.constant 0 : i32
    %c0_i32_1 = arith.constant 0 : i32
    return %c0_i32, %c0_i32_0 : i32, i32
  }
  func.func @transform_6(%arg0: i32) -> (i32, i32) {
    %c0_i32 = arith.constant 0 : i32
    %c0_i32_0 = arith.constant 0 : i32
    %c0_i32_1 = arith.constant 0 : i32
    return %c0_i32, %c0_i32_0 : i32, i32
  }
  func.func @transform_7(%arg0: i32) -> (i32, i32) {
    %c0_i32 = arith.constant 0 : i32
    %c0_i32_0 = arith.constant 0 : i32
    %c0_i32_1 = arith.constant 0 : i32
    return %c0_i32, %c0_i32_0 : i32, i32
  }
  func.func @transform_8(%arg0: i32) -> (i32, i32) {
    %c0_i32 = arith.constant 0 : i32
    %c0_i32_0 = arith.constant 0 : i32
    %c0_i32_1 = arith.constant 0 : i32
    return %c0_i32, %c0_i32_0 : i32, i32
  }
  func.func @transform_9(%arg0: i32) -> (i32, i32) {
    %c0_i32 = arith.constant 0 : i32
    %c0_i32_0 = arith.constant 0 : i32
    return %arg0, %c0_i32 : i32, i32
  }
}

</mosaic_0001>

<llo_original>
// kernel: treasury_nn_forward.1
$region0: #{treasury_nn_forward.1}
  #allocation0 [shape = 'u32[]', space=smem, size = 0x4, offset = 0x4, fixed_abs, tag = 'smem constant byte address 0x4 - core index']
  #allocation1 [shape = 'u32[144,128]{1,0:T(1,128)}', space=vmem, size = 0x12000, scoped, tag = 'internal scratch']
  %s0 = inlined_call_operand.vmem [shape: f32[8,16], index: 0, kind: input, shape index: {}]
  %s1 = inlined_call_operand.hbm [shape: f32[16,128], index: 1, kind: input, shape index: {}]
  %s2 = inlined_call_operand.vmem [shape: f32[1,128], index: 2, kind: input, shape index: {}]
  %s3 = inlined_call_operand.vmem [shape: f32[128,128], index: 3, kind: input, shape index: {}]
  %s4 = inlined_call_operand.vmem [shape: f32[1,128], index: 4, kind: input, shape index: {}]
  %s5 = inlined_call_operand.hbm [shape: f32[128,128], index: 5, kind: input, shape index: {}]
  %s6 = inlined_call_operand.vmem [shape: f32[1,128], index: 6, kind: input, shape index: {}]
  %s7 = inlined_call_operand.vmem [shape: f32[128,7], index: 7, kind: input, shape index: {}]
  %s8 = inlined_call_operand.vmem [shape: f32[1,7], index: 8, kind: input, shape index: {}]
  %s9 = inlined_call_operand.hbm [shape: f32[8,7], index: 9, kind: output, shape index: {}]
  %s10 = sld [smem:[#allocation0]]
  $region54: #{treasury_nn_forward.1} parent=0
    _
  %s12 = ssub.s32 1, %s10
  %s13 = scalar_select 0, %s12, %s10
  $region1: #{treasury_nn_forward.1} parent=0
    #allocation2 [shape = 'u8[8192]{0}', space=vmem, size = 0x2000, scoped, tag = 'input window, operand 1, single buffered']
    #allocation3 [shape = 's32[1]{0}', space=sflag, size = 0x4, scoped, tag = 'scoped memory for treasury_nn_forward.1']
    #allocation4 [shape = 's32[1]{0}', space=sflag, size = 0x4, scoped, tag = 'scoped memory for treasury_nn_forward.1']
    #allocation5 [shape = 'u8[65536]{0}', space=vmem, size = 0x10000, scoped, tag = 'input window, operand 5, single buffered']
    #allocation6 [shape = 's32[1]{0}', space=sflag, size = 0x4, scoped, tag = 'scoped memory for treasury_nn_forward.1']
    #allocation7 [shape = 'u8[4096]{0}', space=vmem, size = 0x1000, scoped, tag = 'output window, operand 0, single buffered']
    %14 = vsyncpa [#allocation3], 0
    %15 = vsyncpa [#allocation6], 0
    %16 = vsyncpa [#allocation4], 0
    // Predicated region
    $region2: #{treasury_nn_forward.1} parent=1 // pred_check
      _
    $region3: #{treasury_nn_forward.1} parent=1 // pred_check_branch
      %18 = sbr.rel (0) target = $region5
    $region4: #{treasury_nn_forward.1} parent=1 // pred_region
      _
    $region5: #{treasury_nn_forward.1} parent=1 // pred_fallthru
      _
    // Predicated region
    $region6: #{treasury_nn_forward.1} parent=1 // pred_check
      _
    $region7: #{treasury_nn_forward.1} parent=1 // pred_check_branch
      %20 = sbr.rel (0) target = $region9
    $region8: #{treasury_nn_forward.1} parent=1 // pred_region
      %s22 = ssub.s32 256, 256
      %23 = vsyncadd [#allocation3], %s22
      %s24 = sshll.u32 [#allocation2], 4
      %s25 = int_to_ptr.vmem [resolvable:$true] %s24
      %30 = dma.hbm_to_vmem [thread:$0]  %s1, 256, %s25, [#allocation3], 128, 128, 8
    $region9: #{treasury_nn_forward.1} parent=1 // pred_fallthru
      _
    // Predicated region
    $region10: #{treasury_nn_forward.1} parent=1 // pred_check
      _
    $region11: #{treasury_nn_forward.1} parent=1 // pred_check_branch
      %32 = sbr.rel (0) target = $region13
    $region12: #{treasury_nn_forward.1} parent=1 // pred_region
      _
    $region13: #{treasury_nn_forward.1} parent=1 // pred_fallthru
      _
    // Predicated region
    $region14: #{treasury_nn_forward.1} parent=1 // pred_check
      _
    $region15: #{treasury_nn_forward.1} parent=1 // pred_check_branch
      %34 = sbr.rel (0) target = $region17
    $region16: #{treasury_nn_forward.1} parent=1 // pred_region
      _
    $region17: #{treasury_nn_forward.1} parent=1 // pred_fallthru
      _
    // Predicated region
    $region18: #{treasury_nn_forward.1} parent=1 // pred_check
      _
    $region19: #{treasury_nn_forward.1} parent=1 // pred_check_branch
      %36 = sbr.rel (0) target = $region21
    $region20: #{treasury_nn_forward.1} parent=1 // pred_region
      _
    $region21: #{treasury_nn_forward.1} parent=1 // pred_fallthru
      _
    // Predicated region
    $region22: #{treasury_nn_forward.1} parent=1 // pred_check
      _
    $region23: #{treasury_nn_forward.1} parent=1 // pred_check_branch
      %38 = sbr.rel (0) target = $region25
    $region24: #{treasury_nn_forward.1} parent=1 // pred_region
      %s40 = ssub.s32 2048, 2048
      %41 = vsyncadd [#allocation6], %s40
      %s42 = sshll.u32 [#allocation5], 4
      %s43 = int_to_ptr.vmem [resolvable:$true] %s42
      %48 = dma.hbm_to_vmem [thread:$0]  %s5, 2048, %s43, [#allocation6], 128, 128, 8
    $region25: #{treasury_nn_forward.1} parent=1 // pred_fallthru
      _
    // Predicated region
    $region26: #{treasury_nn_forward.1} parent=1 // pred_check
      _
    $region27: #{treasury_nn_forward.1} parent=1 // pred_check_branch
      %50 = sbr.rel (0) target = $region29
    $region28: #{treasury_nn_forward.1} parent=1 // pred_region
      _
    $region29: #{treasury_nn_forward.1} parent=1 // pred_fallthru
      _
    // Predicated region
    $region30: #{treasury_nn_forward.1} parent=1 // pred_check
      _
    $region31: #{treasury_nn_forward.1} parent=1 // pred_check_branch
      %52 = sbr.rel (0) target = $region33
    $region32: #{treasury_nn_forward.1} parent=1 // pred_region
      _
    $region33: #{treasury_nn_forward.1} parent=1 // pred_fallthru
      _
    // Predicated region
    $region34: #{treasury_nn_forward.1} parent=1 // pred_check
      _
    $region35: #{treasury_nn_forward.1} parent=1 // pred_check_branch
      %54 = sbr.rel (0) target = $region37
    $region36: #{treasury_nn_forward.1} parent=1 // pred_region
      _
    $region37: #{treasury_nn_forward.1} parent=1 // pred_fallthru
      _
    // Predicated region
    $region38: #{treasury_nn_forward.1} parent=1 // pred_check
      _
    $region39: #{treasury_nn_forward.1} parent=1 // pred_check_branch
      %56 = sbr.rel (0) target = $region41
    $region40: #{treasury_nn_forward.1} parent=1 // pred_region
      %57 = dma.done [#allocation3], 256
    $region41: #{treasury_nn_forward.1} parent=1 // pred_fallthru
      _
    // Predicated region
    $region42: #{treasury_nn_forward.1} parent=1 // pred_check
      _
    $region43: #{treasury_nn_forward.1} parent=1 // pred_check_branch
      %59 = sbr.rel (0) target = $region45
    $region44: #{treasury_nn_forward.1} parent=1 // pred_region
      %60 = dma.done [#allocation6], 2048
    $region45: #{treasury_nn_forward.1} parent=1 // pred_fallthru
      _
    %v61 = vld [vmem:[%s0] sm:$0xff]
    %v62 = vld [vmem:[#allocation2] sm:$0xff]
    %v63 = vld [vmem:[#allocation2 + $0x8] sm:$0xff]
    %v64 = vld [vmem:[%s2] sm:$0x1]
    %v66 = vlaneseq
    %v67 = vshrl.u32 %v66, 7
    %v68 = vsub.s32 0, %v67
    %v69 = vrot.slane %v64, %v68
    %vm71 = vcmask 130048
    %v73 = vsel %vm71, %v61, 0
    %75 = vmatprep.subr.mxu0 0.0
    %76 = vmatpush1.msra.mxu0 0.0
    %77 = vmatprep.subr.mxu0 0.0
    %78 = vmatpush1.msra.mxu0 0.0
    %79 = vmatprep.subr.mxu0 0.0
    %80 = vmatpush1.msra.mxu0 0.0
    %81 = vmatprep.subr.mxu0 0.0
    %82 = vmatpush1.msra.mxu0 0.0
    %83 = vmatprep.subr.mxu0 0.0
    %84 = vmatpush1.msra.mxu0 0.0
    %85 = vmatprep.subr.mxu0 0.0
    %86 = vmatpush1.msra.mxu0 0.0
    %87 = vmatprep.subr.mxu0 0.0
    %88 = vmatpush1.msra.mxu0 0.0
    %89 = vmatprep.subr.mxu0 0.0
    %90 = vmatpush1.msra.mxu0 0.0
    %91 = vmatprep.subr.mxu0 0.0
    %92 = vmatpush1.msra.mxu0 0.0
    %93 = vmatprep.subr.mxu0 0.0
    %94 = vmatpush1.msra.mxu0 0.0
    %95 = vmatprep.subr.mxu0 0.0
    %96 = vmatpush1.msra.mxu0 0.0
    %97 = vmatprep.subr.mxu0 0.0
    %98 = vmatpush1.msra.mxu0 0.0
    %99 = vmatprep.subr.mxu0 0.0
    %100 = vmatpush1.msra.mxu0 0.0
    %101 = vmatprep.subr.mxu0 0.0
    %102 = vmatpush1.msra.mxu0 0.0
    %103 = vmatprep.subr.mxu0 0.0
    %104 = vmatpush1.msra.mxu0 %v63
    %105 = vmatprep.subr.mxu0 0.0
    %106 = vmatpush1.msra.mxu0 %v62
    %107 = vmatprep.subr.mxu0 0.0
    %108 = vmatpush2.msra.mxu0 0.0
    %109 = vmatprep.subr.mxu0 0.0
    %110 = vmatpush2.msra.mxu0 0.0
    %111 = vmatprep.subr.mxu0 0.0
    %112 = vmatpush2.msra.mxu0 0.0
    %113 = vmatprep.subr.mxu0 0.0
    %114 = vmatpush2.msra.mxu0 0.0
    %115 = vmatprep.subr.mxu0 0.0
    %116 = vmatpush2.msra.mxu0 0.0
    %117 = vmatprep.subr.mxu0 0.0
    %118 = vmatpush2.msra.mxu0 0.0
    %119 = vmatprep.subr.mxu0 0.0
    %120 = vmatpush2.msra.mxu0 0.0
    %121 = vmatprep.subr.mxu0 0.0
    %122 = vmatpush2.msra.mxu0 0.0
    %123 = vmatprep.subr.mxu0 0.0
    %124 = vmatpush2.msra.mxu0 0.0
    %125 = vmatprep.subr.mxu0 0.0
    %126 = vmatpush2.msra.mxu0 0.0
    %127 = vmatprep.subr.mxu0 0.0
    %128 = vmatpush2.msra.mxu0 0.0
    %129 = vmatprep.subr.mxu0 0.0
    %130 = vmatpush2.msra.mxu0 0.0
    %131 = vmatprep.subr.mxu0 0.0
    %132 = vmatpush2.msra.mxu0 0.0
    %133 = vmatprep.subr.mxu0 0.0
    %134 = vmatpush2.msra.mxu0 0.0
    %135 = vmatprep.subr.mxu0 0.0
    %136 = vmatpush2.msra.mxu0 0.0
    %137 = vmatprep.subr.mxu0 0.0
    %138 = vmatpush2.msra.mxu0 0.0
    %139 = vmatprep.mubr.f32.mxu0 0.0
    %140 = vmatmul.mubr.f32.gmra.mxu0 %v73
    %v141 = vpop.f32.mrf.mxu0
    %v142 = vadd.f32 %v69, %v141
    %v143 = vpop.f32.mrf.mxu0
    %144 = vdwg.mxu0
    %v145 = vmax.f32 %v142, 0.0
    %v146 = vld [vmem:[%s3] sm:$0xff]
    %v147 = vld [vmem:[%s3 + $0x8] sm:$0xff]
    %v148 = vld [vmem:[%s3 + $0x10] sm:$0xff]
    %v149 = vld [vmem:[%s3 + $0x18] sm:$0xff]
    %v150 = vld [vmem:[%s3 + $0x20] sm:$0xff]
    %v151 = vld [vmem:[%s3 + $0x28] sm:$0xff]
    %v152 = vld [vmem:[%s3 + $0x30] sm:$0xff]
    %v153 = vld [vmem:[%s3 + $0x38] sm:$0xff]
    %v154 = vld [vmem:[%s3 + $0x40] sm:$0xff]
    %v155 = vld [vmem:[%s3 + $0x48] sm:$0xff]
    %v156 = vld [vmem:[%s3 + $0x50] sm:$0xff]
    %v157 = vld [vmem:[%s3 + $0x58] sm:$0xff]
    %v158 = vld [vmem:[%s3 + $0x60] sm:$0xff]
    %v159 = vld [vmem:[%s3 + $0x68] sm:$0xff]
    %v160 = vld [vmem:[%s3 + $0x70] sm:$0xff]
    %v161 = vld [vmem:[%s3 + $0x78] sm:$0xff]
    %v162 = vld [vmem:[%s4] sm:$0x1]
    %v164 = vlaneseq
    %v165 = vshrl.u32 %v164, 7
    %v166 = vsub.s32 0, %v165
    %v167 = vrot.slane %v162, %v166
    %169 = vmatprep.subr.mxu0 0.0
    %170 = vmatpush1.msra.mxu0 %v161
    %171 = vmatprep.subr.mxu0 0.0
    %172 = vmatpush1.msra.mxu0 %v160
    %173 = vmatprep.subr.mxu0 0.0
    %174 = vmatpush1.msra.mxu0 %v159
    %175 = vmatprep.subr.mxu0 0.0
    %176 = vmatpush1.msra.mxu0 %v158
    %177 = vmatprep.subr.mxu0 0.0
    %178 = vmatpush1.msra.mxu0 %v157
    %179 = vmatprep.subr.mxu0 0.0
    %180 = vmatpush1.msra.mxu0 %v156
    %181 = vmatprep.subr.mxu0 0.0
    %182 = vmatpush1.msra.mxu0 %v155
    %183 = vmatprep.subr.mxu0 0.0
    %184 = vmatpush1.msra.mxu0 %v154
    %185 = vmatprep.subr.mxu0 0.0
    %186 = vmatpush1.msra.mxu0 %v153
    %187 = vmatprep.subr.mxu0 0.0
    %188 = vmatpush1.msra.mxu0 %v152
    %189 = vmatprep.subr.mxu0 0.0
    %190 = vmatpush1.msra.mxu0 %v151
    %191 = vmatprep.subr.mxu0 0.0
    %192 = vmatpush1.msra.mxu0 %v150
    %193 = vmatprep.subr.mxu0 0.0
    %194 = vmatpush1.msra.mxu0 %v149
    %195 = vmatprep.subr.mxu0 0.0
    %196 = vmatpush1.msra.mxu0 %v148
    %197 = vmatprep.subr.mxu0 0.0
    %198 = vmatpush1.msra.mxu0 %v147
    %199 = vmatprep.subr.mxu0 0.0
    %200 = vmatpush1.msra.mxu0 %v146
    %201 = vmatprep.subr.mxu0 0.0
    %202 = vmatpush2.msra.mxu0 0.0
    %203 = vmatprep.subr.mxu0 0.0
    %204 = vmatpush2.msra.mxu0 0.0
    %205 = vmatprep.subr.mxu0 0.0
    %206 = vmatpush2.msra.mxu0 0.0
    %207 = vmatprep.subr.mxu0 0.0
    %208 = vmatpush2.msra.mxu0 0.0
    %209 = vmatprep.subr.mxu0 0.0
    %210 = vmatpush2.msra.mxu0 0.0
    %211 = vmatprep.subr.mxu0 0.0
    %212 = vmatpush2.msra.mxu0 0.0
    %213 = vmatprep.subr.mxu0 0.0
    %214 = vmatpush2.msra.mxu0 0.0
    %215 = vmatprep.subr.mxu0 0.0
    %216 = vmatpush2.msra.mxu0 0.0
    %217 = vmatprep.subr.mxu0 0.0
    %218 = vmatpush2.msra.mxu0 0.0
    %219 = vmatprep.subr.mxu0 0.0
    %220 = vmatpush2.msra.mxu0 0.0
    %221 = vmatprep.subr.mxu0 0.0
    %222 = vmatpush2.msra.mxu0 0.0
    %223 = vmatprep.subr.mxu0 0.0
    %224 = vmatpush2.msra.mxu0 0.0
    %225 = vmatprep.subr.mxu0 0.0
    %226 = vmatpush2.msra.mxu0 0.0
    %227 = vmatprep.subr.mxu0 0.0
    %228 = vmatpush2.msra.mxu0 0.0
    %229 = vmatprep.subr.mxu0 0.0
    %230 = vmatpush2.msra.mxu0 0.0
    %231 = vmatprep.subr.mxu0 0.0
    %232 = vmatpush2.msra.mxu0 0.0
    %233 = vmatprep.mubr.f32.mxu0 0.0
    %234 = vmatmul.mubr.f32.gmra.mxu0 %v145
    %v235 = vpop.f32.mrf.mxu0
    %v236 = vadd.f32 %v167, %v235
    %v237 = vpop.f32.mrf.mxu0
    %238 = vdwg.mxu0
    %v239 = vmax.f32 %v236, 0.0
    %v240 = vld [vmem:[#allocation5] sm:$0xff]
    %v241 = vld [vmem:[#allocation5 + $0x8] sm:$0xff]
    %v242 = vld [vmem:[#allocation5 + $0x10] sm:$0xff]
    %v243 = vld [vmem:[#allocation5 + $0x18] sm:$0xff]
    %v244 = vld [vmem:[#allocation5 + $0x20] sm:$0xff]
    %v245 = vld [vmem:[#allocation5 + $0x28] sm:$0xff]
    %v246 = vld [vmem:[#allocation5 + $0x30] sm:$0xff]
    %v247 = vld [vmem:[#allocation5 + $0x38] sm:$0xff]
    %v248 = vld [vmem:[#allocation5 + $0x40] sm:$0xff]
    %v249 = vld [vmem:[#allocation5 + $0x48] sm:$0xff]
    %v250 = vld [vmem:[#allocation5 + $0x50] sm:$0xff]
    %v251 = vld [vmem:[#allocation5 + $0x58] sm:$0xff]
    %v252 = vld [vmem:[#allocation5 + $0x60] sm:$0xff]
    %v253 = vld [vmem:[#allocation5 + $0x68] sm:$0xff]
    %v254 = vld [vmem:[#allocation5 + $0x70] sm:$0xff]
    %v255 = vld [vmem:[#allocation5 + $0x78] sm:$0xff]
    %v256 = vld [vmem:[%s6] sm:$0x1]
    %v258 = vlaneseq
    %v259 = vshrl.u32 %v258, 7
    %v260 = vsub.s32 0, %v259
    %v261 = vrot.slane %v256, %v260
    %263 = vmatprep.subr.mxu0 0.0
    %264 = vmatpush1.msra.mxu0 %v255
    %265 = vmatprep.subr.mxu0 0.0
    %266 = vmatpush1.msra.mxu0 %v254
    %267 = vmatprep.subr.mxu0 0.0
    %268 = vmatpush1.msra.mxu0 %v253
    %269 = vmatprep.subr.mxu0 0.0
    %270 = vmatpush1.msra.mxu0 %v252
    %271 = vmatprep.subr.mxu0 0.0
    %272 = vmatpush1.msra.mxu0 %v251
    %273 = vmatprep.subr.mxu0 0.0
    %274 = vmatpush1.msra.mxu0 %v250
    %275 = vmatprep.subr.mxu0 0.0
    %276 = vmatpush1.msra.mxu0 %v249
    %277 = vmatprep.subr.mxu0 0.0
    %278 = vmatpush1.msra.mxu0 %v248
    %279 = vmatprep.subr.mxu0 0.0
    %280 = vmatpush1.msra.mxu0 %v247
    %281 = vmatprep.subr.mxu0 0.0
    %282 = vmatpush1.msra.mxu0 %v246
    %283 = vmatprep.subr.mxu0 0.0
    %284 = vmatpush1.msra.mxu0 %v245
    %285 = vmatprep.subr.mxu0 0.0
    %286 = vmatpush1.msra.mxu0 %v244
    %287 = vmatprep.subr.mxu0 0.0
    %288 = vmatpush1.msra.mxu0 %v243
    %289 = vmatprep.subr.mxu0 0.0
    %290 = vmatpush1.msra.mxu0 %v242
    %291 = vmatprep.subr.mxu0 0.0
    %292 = vmatpush1.msra.mxu0 %v241
    %293 = vmatprep.subr.mxu0 0.0
    %294 = vmatpush1.msra.mxu0 %v240
    %295 = vmatprep.subr.mxu0 0.0
    %296 = vmatpush2.msra.mxu0 0.0
    %297 = vmatprep.subr.mxu0 0.0
    %298 = vmatpush2.msra.mxu0 0.0
    %299 = vmatprep.subr.mxu0 0.0
    %300 = vmatpush2.msra.mxu0 0.0
    %301 = vmatprep.subr.mxu0 0.0
    %302 = vmatpush2.msra.mxu0 0.0
    %303 = vmatprep.subr.mxu0 0.0
    %304 = vmatpush2.msra.mxu0 0.0
    %305 = vmatprep.subr.mxu0 0.0
    %306 = vmatpush2.msra.mxu0 0.0
    %307 = vmatprep.subr.mxu0 0.0
    %308 = vmatpush2.msra.mxu0 0.0
    %309 = vmatprep.subr.mxu0 0.0
    %310 = vmatpush2.msra.mxu0 0.0
    %311 = vmatprep.subr.mxu0 0.0
    %312 = vmatpush2.msra.mxu0 0.0
    %313 = vmatprep.subr.mxu0 0.0
    %314 = vmatpush2.msra.mxu0 0.0
    %315 = vmatprep.subr.mxu0 0.0
    %316 = vmatpush2.msra.mxu0 0.0
    %317 = vmatprep.subr.mxu0 0.0
    %318 = vmatpush2.msra.mxu0 0.0
    %319 = vmatprep.subr.mxu0 0.0
    %320 = vmatpush2.msra.mxu0 0.0
    %321 = vmatprep.subr.mxu0 0.0
    %322 = vmatpush2.msra.mxu0 0.0
    %323 = vmatprep.subr.mxu0 0.0
    %324 = vmatpush2.msra.mxu0 0.0
    %325 = vmatprep.subr.mxu0 0.0
    %326 = vmatpush2.msra.mxu0 0.0
    %327 = vmatprep.mubr.f32.mxu0 0.0
    %328 = vmatmul.mubr.f32.gmra.mxu0 %v239
    %v329 = vpop.f32.mrf.mxu0
    %v330 = vadd.f32 %v261, %v329
    %v331 = vpop.f32.mrf.mxu0
    %332 = vdwg.mxu0
    %v333 = vmax.f32 %v330, 0.0
    %v334 = vld [vmem:[%s7] sm:$0xff]
    %v335 = vld [vmem:[%s7 + $0x8] sm:$0xff]
    %v336 = vld [vmem:[%s7 + $0x10] sm:$0xff]
    %v337 = vld [vmem:[%s7 + $0x18] sm:$0xff]
    %v338 = vld [vmem:[%s7 + $0x20] sm:$0xff]
    %v339 = vld [vmem:[%s7 + $0x28] sm:$0xff]
    %v340 = vld [vmem:[%s7 + $0x30] sm:$0xff]
    %v341 = vld [vmem:[%s7 + $0x38] sm:$0xff]
    %v342 = vld [vmem:[%s7 + $0x40] sm:$0xff]
    %v343 = vld [vmem:[%s7 + $0x48] sm:$0xff]
    %v344 = vld [vmem:[%s7 + $0x50] sm:$0xff]
    %v345 = vld [vmem:[%s7 + $0x58] sm:$0xff]
    %v346 = vld [vmem:[%s7 + $0x60] sm:$0xff]
    %v347 = vld [vmem:[%s7 + $0x68] sm:$0xff]
    %v348 = vld [vmem:[%s7 + $0x70] sm:$0xff]
    %v349 = vld [vmem:[%s7 + $0x78] sm:$0xff]
    %v350 = vld [vmem:[%s8] sm:$0x1]
    %v352 = vlaneseq
    %v353 = vshrl.u32 %v352, 7
    %v354 = vsub.s32 0, %v353
    %v355 = vrot.slane %v350, %v354
    %357 = vmatprep.subr.mxu0 0.0
    %358 = vmatpush1.msra.mxu0 %v349
    %359 = vmatprep.subr.mxu0 0.0
    %360 = vmatpush1.msra.mxu0 %v348
    %361 = vmatprep.subr.mxu0 0.0
    %362 = vmatpush1.msra.mxu0 %v347
    %363 = vmatprep.subr.mxu0 0.0
    %364 = vmatpush1.msra.mxu0 %v346
    %365 = vmatprep.subr.mxu0 0.0
    %366 = vmatpush1.msra.mxu0 %v345
    %367 = vmatprep.subr.mxu0 0.0
    %368 = vmatpush1.msra.mxu0 %v344
    %369 = vmatprep.subr.mxu0 0.0
    %370 = vmatpush1.msra.mxu0 %v343
    %371 = vmatprep.subr.mxu0 0.0
    %372 = vmatpush1.msra.mxu0 %v342
    %373 = vmatprep.subr.mxu0 0.0
    %374 = vmatpush1.msra.mxu0 %v341
    %375 = vmatprep.subr.mxu0 0.0
    %376 = vmatpush1.msra.mxu0 %v340
    %377 = vmatprep.subr.mxu0 0.0
    %378 = vmatpush1.msra.mxu0 %v339
    %379 = vmatprep.subr.mxu0 0.0
    %380 = vmatpush1.msra.mxu0 %v338
    %381 = vmatprep.subr.mxu0 0.0
    %382 = vmatpush1.msra.mxu0 %v337
    %383 = vmatprep.subr.mxu0 0.0
    %384 = vmatpush1.msra.mxu0 %v336
    %385 = vmatprep.subr.mxu0 0.0
    %386 = vmatpush1.msra.mxu0 %v335
    %387 = vmatprep.subr.mxu0 0.0
    %388 = vmatpush1.msra.mxu0 %v334
    %389 = vmatprep.subr.mxu0 0.0
    %390 = vmatpush2.msra.mxu0 0.0
    %391 = vmatprep.subr.mxu0 0.0
    %392 = vmatpush2.msra.mxu0 0.0
    %393 = vmatprep.subr.mxu0 0.0
    %394 = vmatpush2.msra.mxu0 0.0
    %395 = vmatprep.subr.mxu0 0.0
    %396 = vmatpush2.msra.mxu0 0.0
    %397 = vmatprep.subr.mxu0 0.0
    %398 = vmatpush2.msra.mxu0 0.0
    %399 = vmatprep.subr.mxu0 0.0
    %400 = vmatpush2.msra.mxu0 0.0
    %401 = vmatprep.subr.mxu0 0.0
    %402 = vmatpush2.msra.mxu0 0.0
    %403 = vmatprep.subr.mxu0 0.0
    %404 = vmatpush2.msra.mxu0 0.0
    %405 = vmatprep.subr.mxu0 0.0
    %406 = vmatpush2.msra.mxu0 0.0
    %407 = vmatprep.subr.mxu0 0.0
    %408 = vmatpush2.msra.mxu0 0.0
    %409 = vmatprep.subr.mxu0 0.0
    %410 = vmatpush2.msra.mxu0 0.0
    %411 = vmatprep.subr.mxu0 0.0
    %412 = vmatpush2.msra.mxu0 0.0
    %413 = vmatprep.subr.mxu0 0.0
    %414 = vmatpush2.msra.mxu0 0.0
    %415 = vmatprep.subr.mxu0 0.0
    %416 = vmatpush2.msra.mxu0 0.0
    %417 = vmatprep.subr.mxu0 0.0
    %418 = vmatpush2.msra.mxu0 0.0
    %419 = vmatprep.subr.mxu0 0.0
    %420 = vmatpush2.msra.mxu0 0.0
    %421 = vmatprep.mubr.f32.mxu0 0.0
    %422 = vmatmul.mubr.f32.gmra.mxu0 %v333
    %v423 = vpop.f32.mrf.mxu0
    %v424 = vadd.f32 %v355, %v423
    %v425 = vpop.f32.mrf.mxu0
    %426 = vdwg.mxu0
    %vm427 = vcmask 56320
    %428 = vst.msk [vmem:[#allocation7] sm:$0xff] %vm427, %v424
    // Predicated region
    $region46: #{treasury_nn_forward.1} parent=1 // pred_check
      _
    $region47: #{treasury_nn_forward.1} parent=1 // pred_check_branch
      %430 = sbr.rel (0) target = $region49
    $region48: #{treasury_nn_forward.1} parent=1 // pred_region
      %s432 = ssub.s32 128, 128
      %433 = vsyncadd [#allocation4], %s432
      %s435 = sshll.u32 [#allocation7], 4
      %s436 = int_to_ptr.vmem [resolvable:$true] %s435
      %438 = dma.vmem_to_hbm [thread:$0]  %s436, 128, %s9, [#allocation4]
    $region49: #{treasury_nn_forward.1} parent=1 // pred_fallthru
      _
    // Predicated region
    $region50: #{treasury_nn_forward.1} parent=1 // pred_check
      _
    $region51: #{treasury_nn_forward.1} parent=1 // pred_check_branch
      %440 = sbr.rel (0) target = $region53
    $region52: #{treasury_nn_forward.1} parent=1 // pred_region
      %441 = dma.done [#allocation4], 128
    $region53: #{treasury_nn_forward.1} parent=1 // pred_fallthru
      _
    %442 = vsyncpa [#allocation3], 1
    %443 = vsyncpa [#allocation6], 1
    %444 = vsyncpa [#allocation4], 1

</llo_original>
